<compile_context>
chip_gen: v7x
topology: tpu7x:2x2x1
jax: 0.10.0
libtpu: 0.0.40
codegen_flags: <defaults>
</compile_context>

<pallas_src>
import functools

import jax
import jax.numpy as jnp
from jax import lax
from jax.experimental import pallas as pl
from jax.experimental.pallas import tpu as pltpu


# FLSD-53 gamma schedule (the `gamma_dic` of the reference implementation).
GAMMA_DIC = {0.2: 5.0, 0.5: 3.0}

_LANES = 128
_SUBLANES = 8
_MIB = 1024 * 1024
# Full-width f32 temporaries live at once inside the kernel (z, exp(z), iota,
# select, slack) -- used only for the VMEM footprint estimate.
_F32_TEMPS = 5


def _int_pow(x, exponent):
    """x ** exponent; pure VPU multiplies when the exponent is a small integer."""
    e = float(exponent)
    if e == 0.0:
        return jnp.ones_like(x)
    if e.is_integer() and 0 < e <= 16:
        result = x
        for _ in range(int(e) - 1):
            result = result * x
        return result
    # Non-integer default gamma: only evaluated on a (TN, 1) column -> cheap.
    return jnp.power(x, jnp.float32(e))


def _flsd_kernel(logits_ref, target_ref, out_ref, *,
                 default_gamma, n_rows, tile_rows, gamma_keys, gamma_vals,
                 bf16_exp):
    """One row tile: fused log-softmax gather + FLSD focal weighting.

    logits_ref : (TN, C_pad) native dtype in VMEM (padded lanes hold -inf)
    target_ref : (TN, 1) int32 in VMEM
    out_ref    : (1, 8, 128) f32 -- per-tile partial loss sum (broadcast)
    """
    i = pl.program_id(0)

    # Upcast per tile (HBM traffic stays in the native dtype).
    x = logits_ref[...].astype(jnp.float32)                      # (TN, Cp)
    t = target_ref[...]                                          # (TN, 1) int32

    # Numerically stable logsumexp along the class (lane) axis.
    # Padded lanes are -inf -> never win the max, exp(-inf) == 0 in the sum.
    m = jnp.max(x, axis=1, keepdims=True)                        # (TN, 1)
    z = x - m                                                    # x dead after this
    if bf16_exp:
        # EUP relief on v6e/v7x (bf16 exp, f32 accumulate).  Off by default.
        s = jnp.sum(jnp.exp(z.astype(jnp.bfloat16)), axis=1, keepdims=True,
                    dtype=jnp.float32)
    else:
        s = jnp.sum(jnp.exp(z), axis=1, keepdims=True)
    lse = jnp.log(s)                                             # (TN, 1)

    # Fused gather on z: pick the target shifted logit with a lane-iota mask;
    # the full (TN, Cp) log_softmax is never materialized and no separate x_t-m
    # temporary is needed.
    col_ids = lax.broadcasted_iota(jnp.int32, z.shape, 1)
    z_t = jnp.sum(jnp.where(col_ids == t, z, 0.0), axis=1, keepdims=True)
    logpt = z_t - lse                                            # (TN, 1)
    pt = jnp.exp(logpt)                                          # (TN, 1)

    # (1 - pt) ** gamma with the FLSD schedule; integer gammas stay on the VPU.
    omp = jnp.maximum(1.0 - pt, 0.0)
    pow_term = _int_pow(omp, default_gamma)                      # pt >= 0.5 branch
    for k, g in zip(reversed(gamma_keys), reversed(gamma_vals)):
        pow_term = jnp.where(pt < jnp.float32(k), _int_pow(omp, g), pow_term)

    loss = -pow_term * logpt                                     # (TN, 1)

    # Mask rows past the true batch size (last tile may cover padded rows).
    # NOTE: keep this a select (not a multiply) so NaN/Inf in padded rows does
    # not propagate.
    row_ids = lax.broadcasted_iota(jnp.int32, loss.shape, 0) + i * tile_rows
    loss = jnp.where(row_ids < n_rows, loss, 0.0)

    partial = jnp.sum(loss)
    # One lane-dense vreg per tile; the wrapper reads [:, 0, 0] and reduces.
    out_ref[...] = jnp.full(out_ref.shape, partial, dtype=jnp.float32)


def _round_up(v, m):
    return ((v + m - 1) // m) * m


def _tpu_generation_info():
    """(vmem_capacity_bytes, is_v5e) with safe fallbacks."""
    vmem_cap = 64 * _MIB            # conservative (v7x-sized) fallback
    try:
        vmem_cap = int(pltpu.get_tpu_info().vmem_capacity_bytes)
    except Exception:
        pass
    is_v5e = False
    try:
        kind = jax.devices()[0].device_kind.lower()
        is_v5e = "v5" in kind
    except Exception:
        pass
    return vmem_cap, is_v5e


def focal_loss_adaptive(logits, target, *, gamma=0.0, size_average=True,
                        bf16_exp=False):
    """JAX wrapper: logits (N, C) float (any float dtype), target (N,) int -> scalar."""
    n, c = logits.shape
    if not jnp.issubdtype(logits.dtype, jnp.floating):
        logits = logits.astype(jnp.float32)

    # Lane-pad the class axis to a multiple of 128 with -inf so every vreg is
    # lane-dense; pads never win the max and add exactly 0 to the exp-sum.
    c_pad = max(_LANES, _round_up(c, _LANES))
    if c_pad != c:
        logits = jnp.pad(logits, ((0, 0), (0, c_pad - c)),
                         constant_values=-jnp.inf)

    target_2d = target.reshape(n, 1).astype(jnp.int32)

    # ---- Generation-aware tile / VMEM sizing -------------------------------
    itemsize = jnp.dtype(logits.dtype).itemsize
    vmem_cap, is_v5e = _tpu_generation_info()
    small_vmem = vmem_cap <= 64 * _MIB              # v7x-class part

    # Native-dtype logits bytes targeted per tile: ~4 MiB (v6e/v7x, fast HBM),
    # ~2 MiB on v5e (slower HBM saturates sooner, keeps f32 temp pressure low).
    native_budget = (2 if is_v5e else 4) * _MIB
    # Scoped-VMEM limit: leave headroom on v7x's 64 MiB part; 64 MiB on the
    # 128 MiB parts is ample for the bigger tiles.
    vmem_limit = 48 * _MIB if small_vmem else 64 * _MIB

    # Per-row VMEM cost: double-buffered native input + full-width f32 temps.
    bytes_per_row = c_pad * (2 * itemsize + _F32_TEMPS * 4)

    # Huge-C guard: make sure even an 8-row tile fits; scale the limit up
    # (bounded by physical VMEM) instead of silently spilling.
    min_tile_bytes = _SUBLANES * bytes_per_row
    if min_tile_bytes > (vmem_limit * 3) // 4:
        vmem_limit = min(max(vmem_cap - 8 * _MIB, vmem_limit),
                         (min_tile_bytes * 4) // 3 + 4 * _MIB)
        # TODO(synk): for vocabularies too large even for an 8-row tile, add a
        # class-axis grid dimension with an online (running max / running
        # sum-exp) logsumexp accumulator.

    tn_budget = max(_SUBLANES, native_budget // (c_pad * itemsize))
    tn_fit = max(_SUBLANES, ((vmem_limit * 3) // 4) // bytes_per_row)
    tn = (min(tn_budget, tn_fit) // _SUBLANES) * _SUBLANES

    n_up = _round_up(n, _SUBLANES)
    tn = min(tn, n_up)

    # v7x has 2 TensorCores: keep >= 2 grid steps (when the batch allows it)
    # so the "parallel" grid axis actually feeds both cores.
    if small_vmem and n_up >= 2 * _SUBLANES:
        half = max(_SUBLANES, ((n_up // 2) // _SUBLANES) * _SUBLANES)
        tn = min(tn, half)

    tn = max(_SUBLANES, tn)
    num_tiles = (n + tn - 1) // tn
    # ------------------------------------------------------------------------

    keys = tuple(sorted(GAMMA_DIC.keys()))
    vals = tuple(GAMMA_DIC[k] for k in keys)

    # bf16 exp needs bf16 EUP support (v6e/v7x, not v5e).
    use_bf16_exp = bool(bf16_exp) and not is_v5e

    kernel = functools.partial(
        _flsd_kernel,
        default_gamma=float(gamma),
        n_rows=n,
        tile_rows=tn,
        gamma_keys=keys,
        gamma_vals=vals,
        bf16_exp=use_bf16_exp,
    )

    partials = pl.pallas_call(
        kernel,
        out_shape=jax.ShapeDtypeStruct((num_tiles, _SUBLANES, _LANES), jnp.float32),
        grid=(num_tiles,),
        in_specs=[
            pl.BlockSpec((tn, c_pad), lambda i: (i, 0)),
            pl.BlockSpec((tn, 1), lambda i: (i, 0)),
        ],
        out_specs=pl.BlockSpec((1, _SUBLANES, _LANES), lambda i: (i, 0, 0)),
        compiler_params=pltpu.CompilerParams(
            dimension_semantics=("parallel",),
            vmem_limit_bytes=int(vmem_limit),
        ),
    )(logits, target_2d)

    total = jnp.sum(partials[:, 0, 0])
    if size_average:
        return total / jnp.float32(n)
    return total


def _reference_loss(logits, target, *, gamma=0.0, size_average=True):
    """Pure-JAX reference of the same forward pass (sanity check)."""
    logits = logits.astype(jnp.float32)
    logp = jax.nn.log_softmax(logits, axis=1)
    logpt = jnp.take_along_axis(logp, target.reshape(-1, 1), axis=1).reshape(-1)
    pt = jnp.exp(logpt)
    g = jnp.full_like(pt, float(gamma))
    for k in sorted(GAMMA_DIC.keys(), reverse=True):
        g = jnp.where(pt < k, GAMMA_DIC[k], g)
    pow_term = jnp.where(g == 0.0, jnp.ones_like(pt),
                         jnp.power(jnp.maximum(1.0 - pt, 0.0), g))
    loss = -pow_term * logpt
    return jnp.mean(loss) if size_average else jnp.sum(loss)


if __name__ == "__main__":
    key = jax.random.PRNGKey(0)
    k1, k2, k3, k4 = jax.random.split(key, 4)

    # Case 1: small f32 batch, mean reduction (module defaults).
    N1, C1 = 8, 32
    logits1 = jax.random.normal(k1, (N1, C1), dtype=jnp.float32) * 3.0
    target1 = jax.random.randint(k2, (N1,), 0, C1, dtype=jnp.int32)
    out1 = jax.block_until_ready(
        focal_loss_adaptive(logits1, target1, gamma=0.0, size_average=True))
    ref1 = jax.block_until_ready(
        _reference_loss(logits1, target1, gamma=0.0, size_average=True))
    assert jnp.allclose(out1, ref1, rtol=1e-3, atol=1e-3), (out1, ref1)

    # Case 2: bf16 logits (native-dtype HBM path), class count not a lane
    # multiple (exercises -inf padding), batch not a tile multiple (exercises
    # row masking), sum reduction, non-zero default gamma.
    N2, C2 = 13, 40
    logits2 = (jax.random.normal(k3, (N2, C2), dtype=jnp.float32) * 3.0
               ).astype(jnp.bfloat16)
    target2 = jax.random.randint(k4, (N2,), 0, C2, dtype=jnp.int32)
    out2 = jax.block_until_ready(
        focal_loss_adaptive(logits2, target2, gamma=2.0, size_average=False))
    ref2 = jax.block_until_ready(
        _reference_loss(logits2, target2, gamma=2.0, size_average=False))
    assert jnp.allclose(out2, ref2, rtol=1e-3, atol=1e-3), (out2, ref2)

    print("KERNEL_OK")
</pallas_src>

<mosaic_0001>
module attributes {stable_mosaic.version = 11 : i64} {
  func.func @_flsd_kernel(%arg0: i32, %arg1: memref<8x128xf32, #tpu.memory_space<vmem>>, %arg2: memref<8x1xi32, #tpu.memory_space<vmem>>, %arg3: memref<1x8x128xf32, #tpu.memory_space<vmem>>) attributes {dimension_semantics = [#tpu.dimension_semantics<parallel>], iteration_bounds = array<i64: 1>, scalar_prefetch = 0 : i64, scratch_operands = 0 : i64, tpu.core_type = #tpu.core_type<tc>, window_params = [{transform_indices = @transform_0, window_bounds = array<i64: 8, 128>}, {transform_indices = @transform_1, window_bounds = array<i64: 8, 1>}, {transform_indices = @transform_2, window_bounds = array<i64: 1, 8, 128>}]} {
    %c0 = arith.constant 0 : index
    %c0_0 = arith.constant 0 : index
    %0 = vector.load %arg1[%c0, %c0_0] : memref<8x128xf32, #tpu.memory_space<vmem>>, vector<8x128xf32>
    %c0_1 = arith.constant 0 : index
    %c0_2 = arith.constant 0 : index
    %1 = vector.load %arg2[%c0_1, %c0_2] : memref<8x1xi32, #tpu.memory_space<vmem>>, vector<8x1xi32>
    %cst = arith.constant dense<0xFF800000> : vector<8xf32>
    %2 = vector.multi_reduction <maximumf>, %0, %cst [1] : vector<8x128xf32> to vector<8xf32>
    %3 = vector.shape_cast %2 : vector<8xf32> to vector<8x1xf32>
    %4 = vector.broadcast %3 : vector<8x1xf32> to vector<8x128xf32>
    %5 = arith.subf %0, %4 : vector<8x128xf32>
    %6 = math.exp %5 : vector<8x128xf32>
    %cst_3 = arith.constant dense<0.000000e+00> : vector<8xf32>
    %7 = vector.multi_reduction <add>, %6, %cst_3 [1] : vector<8x128xf32> to vector<8xf32>
    %8 = vector.shape_cast %7 : vector<8xf32> to vector<8x1xf32>
    %9 = math.log %8 : vector<8x1xf32>
    %10 = tpu.iota {dimensions = array<i32: 1>} : vector<8x128xi32>
    %11 = vector.broadcast %1 : vector<8x1xi32> to vector<8x128xi32>
    %12 = arith.cmpi eq, %10, %11 : vector<8x128xi32>
    %cst_4 = arith.constant 0.000000e+00 : f32
    %13 = vector.broadcast %cst_4 : f32 to vector<8x128xf32>
    %14 = arith.select %12, %5, %13 : vector<8x128xi1>, vector<8x128xf32>
    %cst_5 = arith.constant dense<0.000000e+00> : vector<8xf32>
    %15 = vector.multi_reduction <add>, %14, %cst_5 [1] : vector<8x128xf32> to vector<8xf32>
    %16 = vector.shape_cast %15 : vector<8xf32> to vector<8x1xf32>
    %17 = arith.subf %16, %9 : vector<8x1xf32>
    %18 = math.exp %17 : vector<8x1xf32>
    %cst_6 = arith.constant 1.000000e+00 : f32
    %19 = vector.broadcast %cst_6 : f32 to vector<8x1xf32>
    %20 = arith.subf %19, %18 : vector<8x1xf32>
    %cst_7 = arith.constant 0.000000e+00 : f32
    %21 = vector.broadcast %cst_7 : f32 to vector<8x1xf32>
    %22 = arith.maximumf %20, %21 : vector<8x1xf32>
    %cst_8 = arith.constant 1.000000e+00 : f32
    %23 = vector.broadcast %cst_8 : f32 to vector<8x1xf32>
    %cst_9 = arith.constant 5.000000e-01 : f32
    %24 = vector.broadcast %cst_9 : f32 to vector<8x1xf32>
    %25 = arith.cmpf olt, %18, %24 : vector<8x1xf32>
    %26 = arith.mulf %22, %22 : vector<8x1xf32>
    %27 = arith.mulf %26, %22 : vector<8x1xf32>
    %28 = arith.select %25, %27, %23 : vector<8x1xi1>, vector<8x1xf32>
    %cst_10 = arith.constant 2.000000e-01 : f32
    %29 = vector.broadcast %cst_10 : f32 to vector<8x1xf32>
    %30 = arith.cmpf olt, %18, %29 : vector<8x1xf32>
    %31 = arith.mulf %22, %22 : vector<8x1xf32>
    %32 = arith.mulf %31, %22 : vector<8x1xf32>
    %33 = arith.mulf %32, %22 : vector<8x1xf32>
    %34 = arith.mulf %33, %22 : vector<8x1xf32>
    %35 = arith.select %30, %34, %28 : vector<8x1xi1>, vector<8x1xf32>
    %cst_11 = arith.constant 0.000000e+00 : f32
    %36 = vector.broadcast %cst_11 : f32 to vector<8x1xf32>
    %37 = arith.subf %36, %35 : vector<8x1xf32>
    %38 = arith.mulf %37, %17 : vector<8x1xf32>
    %39 = tpu.iota {dimensions = array<i32: 0>} : vector<8x1xi32>
    %c8_i32 = arith.constant 8 : i32
    %40 = arith.muli %arg0, %c8_i32 : i32
    %41 = vector.broadcast %40 : i32 to vector<8x1xi32>
    %42 = arith.addi %39, %41 : vector<8x1xi32>
    %c8_i32_12 = arith.constant 8 : i32
    %43 = vector.broadcast %c8_i32_12 : i32 to vector<8x1xi32>
    %44 = arith.cmpi slt, %42, %43 : vector<8x1xi32>
    %cst_13 = arith.constant 0.000000e+00 : f32
    %45 = vector.broadcast %cst_13 : f32 to vector<8x1xf32>
    %46 = arith.select %44, %38, %45 : vector<8x1xi1>, vector<8x1xf32>
    %47 = vector.shape_cast %46 : vector<8x1xf32> to vector<1x8x1xf32>
    %cst_14 = arith.constant dense<0.000000e+00> : vector<1xf32>
    %48 = vector.multi_reduction <add>, %47, %cst_14 [1, 2] : vector<1x8x1xf32> to vector<1xf32>
    %49 = vector.shape_cast %48 : vector<1xf32> to vector<1x1x1xf32>
    %50 = vector.extract %49[0, 0, 0] : f32 from vector<1x1x1xf32>
    %51 = vector.broadcast %50 : f32 to vector<1x8x128xf32>
    %c0_15 = arith.constant 0 : index
    %c0_16 = arith.constant 0 : index
    %c0_17 = arith.constant 0 : index
    %52 = vector.load %arg3[%c0_15, %c0_16, %c0_17] : memref<1x8x128xf32, #tpu.memory_space<vmem>>, vector<1x8x128xf32>
    tpu.vector_store %arg3[%c0_15, %c0_16, %c0_17], %51 {strides = array<i32>} : memref<1x8x128xf32, #tpu.memory_space<vmem>>, vector<1x8x128xf32>,
    return
  }
  func.func @transform_0(%arg0: i32) -> (i32, i32) {
    %c0_i32 = arith.constant 0 : i32
    %c0_i32_0 = arith.constant 0 : i32
    return %arg0, %c0_i32 : i32, i32
  }
  func.func @transform_1(%arg0: i32) -> (i32, i32) {
    %c0_i32 = arith.constant 0 : i32
    %c0_i32_0 = arith.constant 0 : i32
    return %arg0, %c0_i32 : i32, i32
  }
  func.func @transform_2(%arg0: i32) -> (i32, i32, i32) {
    %c0_i32 = arith.constant 0 : i32
    %c0_i32_0 = arith.constant 0 : i32
    %c0_i32_1 = arith.constant 0 : i32
    return %arg0, %c0_i32, %c0_i32_0 : i32, i32, i32
  }
}

</mosaic_0001>

<llo_original>
// kernel: tpu_custom_call.1
$region0: #{tpu_custom_call.1}
  #allocation0 [shape = 'u32[]', space=smem, size = 0x4, offset = 0x4, fixed_abs, tag = 'smem constant byte address 0x4 - core index']
  #allocation1 [shape = 'u32[144,128]{1,0:T(1,128)}', space=vmem, size = 0x12000, scoped, tag = 'internal scratch']
  %s0 = inlined_call_operand.vmem [shape: f32[8,128], index: 0, kind: input, shape index: {}]
  %s1 = inlined_call_operand.vmem [shape: s32[8,1], index: 1, kind: input, shape index: {}]
  %s2 = inlined_call_operand.hbm [shape: f32[1,8,128], index: 2, kind: output, shape index: {}]
  %s3 = sld [smem:[#allocation0]]
  $region18: #{tpu_custom_call.1} parent=0
    _
  %s5 = ssub.s32 1, %s3
  %s6 = scalar_select 0, %s5, %s3
  $region1: #{tpu_custom_call.1} parent=0
    #allocation2 [shape = 'u8[4096]{0}', space=vmem, size = 0x1000, scoped, tag = 'output window, operand 0, single buffered']
    #allocation3 [shape = 's32[1]{0}', space=sflag, size = 0x4, scoped, tag = 'scoped memory for tpu_custom_call.1']
    %7 = vsyncpa [#allocation3], 0
    // Predicated region
    $region2: #{tpu_custom_call.1} parent=1 // pred_check
      _
    $region3: #{tpu_custom_call.1} parent=1 // pred_check_branch
      %9 = sbr.rel (0) target = $region5
    $region4: #{tpu_custom_call.1} parent=1 // pred_region
      _
    $region5: #{tpu_custom_call.1} parent=1 // pred_fallthru
      _
    // Predicated region
    $region6: #{tpu_custom_call.1} parent=1 // pred_check
      _
    $region7: #{tpu_custom_call.1} parent=1 // pred_check_branch
      %11 = sbr.rel (0) target = $region9
    $region8: #{tpu_custom_call.1} parent=1 // pred_region
      _
    $region9: #{tpu_custom_call.1} parent=1 // pred_fallthru
      _
    %v12 = vld [vmem:[%s0] sm:$0xff]
    %v13 = vld [vmem:[%s1] sm:$0xff]
    %14 = vmax.xlane.f32.xlu0 %v12
    %v15 = vpop.xlane.xlu0 %14
    %v16 = vsub.f32 %v12, %v15
    %v17 = vmul.f32 %v16, 1.442695
    %v18 = vpow.pop %v17
    %19 = vadd.xlane.f32.xlu0 %v18
    %v20 = vpop.xlane.xlu0 %19
    %v21 = vlog2.pop %v20
    %v22 = vmul.f32 %v21, 0.6931472
    %v23 = vlaneseq
    %v24 = vand.u32 %v23, 127
    %25 = vset.pattern.permute.xlu0 0
    %26 = vperm.xlu0 %25, %v13
    %v27 = vpop.permute.xlu0 %26
    %vm28 = vcmp.eq.s32.totalorder %v24, %v27
    %v29 = vsel %vm28, %v16, 0.0
    %30 = vadd.xlane.f32.xlu0 %v29
    %v31 = vpop.xlane.xlu0 %30
    %v32 = vsub.f32 %v31, %v22
    %v33 = vmul.f32 %v32, 1.442695
    %v34 = vpow.pop %v33
    %v35 = vsub.f32 1.0, %v34
    %v36 = vmax.f32 %v35, 0.0
    %vm37 = vcmp.lt.f32.partialorder %v34, 0.5
    %v38 = vmul.f32 %v36, %v36
    %v39 = vmul.f32 %v38, %v36
    %v40 = vsel %vm37, %v39, 1.0
    %vm41 = vcmp.lt.f32.partialorder %v34, 0.2
    %v42 = vmul.f32 %v39, %v36
    %v43 = vmul.f32 %v42, %v36
    %v44 = vsel %vm41, %v43, %v40
    %v45 = vsub.f32 0.0, %v44
    %v46 = vmul.f32 %v45, %v32
    %v47 = vlaneseq
    %v48 = vshrl.u32 %v47, 7
    %s49 = smul.u32 0, 8
    %v50 = vstv %s49
    %v51 = vadd.s32 %v48, %v50
    %vm52 = vcmp.lt.s32.totalorder %v51, 8
    %v53 = vsel %vm52, %v46, 0.0
    %vm54 = vcmask 7168
    %v55 = vsel %vm54, %v53, 0.0
    %56 = vadd.xlane.f32.xlu0 %v55
    %v57 = vpop.xlane.xlu0 %56
    %v58 = vrot.slane %v57, 4
    %v59 = vadd.f32 %v57, %v58
    %v60 = vrot.slane %v59, 2
    %v61 = vadd.f32 %v59, %v60
    %v62 = vrot.slane %v61, 1
    %v63 = vadd.f32 %v61, %v62
    %s64 = vtos %v63
    %v65 = vstv %s64
    %66 = vst [vmem:[#allocation2] sm:$0xff] %v65
    // Predicated region
    $region10: #{tpu_custom_call.1} parent=1 // pred_check
      _
    $region11: #{tpu_custom_call.1} parent=1 // pred_check_branch
      %68 = sbr.rel (0) target = $region13
    $region12: #{tpu_custom_call.1} parent=1 // pred_region
      %s70 = ssub.s32 128, 128
      %71 = vsyncadd [#allocation3], %s70
      %s73 = sshll.u32 [#allocation2], 4
      %s74 = int_to_ptr.vmem [resolvable:$true] %s73
      %76 = dma.vmem_to_hbm [thread:$0]  %s74, 128, %s2, [#allocation3]
    $region13: #{tpu_custom_call.1} parent=1 // pred_fallthru
      _
    // Predicated region
    $region14: #{tpu_custom_call.1} parent=1 // pred_check
      _
    $region15: #{tpu_custom_call.1} parent=1 // pred_check_branch
      %78 = sbr.rel (0) target = $region17
    $region16: #{tpu_custom_call.1} parent=1 // pred_region
      %79 = dma.done [#allocation3], 128
    $region17: #{tpu_custom_call.1} parent=1 // pred_fallthru
      _
    %80 = vsyncpa [#allocation3], 1

</llo_original>
